<compile_context>
chip_gen: v7x
topology: tpu7x:2x2x1
jax: 0.10.0
libtpu: 0.0.40
codegen_flags: <defaults>
</compile_context>

<pallas_src>
import functools
import math

import jax
import jax.numpy as jnp
from jax.experimental import pallas as pl
from jax.experimental.pallas import tpu as pltpu


def _lgcn_kernel(a_ref, x_ref, o_ref, xk_ref, acc_ref, *, tm, tn, n_pad, nj):
    """One grid step of the tiled LGCN propagation.

    a_ref  : (tm, tn)      bf16  streamed Â tile (block (i, j))
    x_ref  : (n_pad, F)    f32   raw features, fully VMEM-resident
    o_ref  : (1, tm, F)    f32   output block for layer k, row tile i
    xk_ref : (2*n_pad, F)  f32   persistent ping-pong scratch: rows
                                 [b*n_pad, (b+1)*n_pad) hold buffer b
    acc_ref: (tm, F)       f32   per-row-tile accumulator over j
    """
    k = pl.program_id(0)
    i = pl.program_id(1)
    j = pl.program_id(2)

    # Layer k reads buffer (k+1) % 2 and writes buffer k % 2, so layer 0 reads
    # buffer 1.  Stage the raw features there exactly once.
    @pl.when((k == 0) & (i == 0) & (j == 0))
    def _():
        xk_ref[pl.ds(n_pad, n_pad), :] = x_ref[...]

    @pl.when(j == 0)
    def _():
        acc_ref[...] = jnp.zeros_like(acc_ref)

    prev = (k + 1) % 2   # buffer holding x_k
    cur = k % 2          # buffer receiving x_{k+1}

    rhs_start = pl.multiple_of(prev * n_pad + j * tn, tn)
    rhs = xk_ref[pl.ds(rhs_start, tn), :]                       # (tn, F) f32
    # MXU: bf16 x bf16 -> f32 accumulation.  Â coefficients are <= 1, the
    # running sum stays in f32 (only the per-matmul operands are rounded).
    acc_ref[...] += jnp.dot(
        a_ref[...], rhs.astype(jnp.bfloat16),
        preferred_element_type=jnp.float32)

    @pl.when(j == nj - 1)
    def _():
        res = acc_ref[...]
        o_ref[0] = res                                          # Â^{k+1} X rows i
        dst_start = pl.multiple_of(cur * n_pad + i * tm, tm)
        xk_ref[pl.ds(dst_start, tm), :] = res                   # feed next layer


def _dense_gcn_norm_adj(edge_index: jnp.ndarray, num_nodes: int) -> jnp.ndarray:
    """Dense Â = D^{-1/2}(A + I)D^{-1/2} (PyG gcn_norm, add_self_loops=True)."""
    row, col = edge_index[0], edge_index[1]
    loop = jnp.arange(num_nodes, dtype=edge_index.dtype)
    row = jnp.concatenate([row, loop])
    col = jnp.concatenate([col, loop])
    w = jnp.ones(row.shape[0], dtype=jnp.float32)
    deg = jnp.zeros((num_nodes,), jnp.float32).at[col].add(w)
    deg_inv_sqrt = jnp.where(deg > 0, 1.0 / jnp.sqrt(deg), 0.0)
    norm = deg_inv_sqrt[row] * w * deg_inv_sqrt[col]
    # out[i] = sum_{edge (j->i)} norm * x[j]  =>  Â[i, j] = norm
    a = jnp.zeros((num_nodes, num_nodes), jnp.float32).at[col, row].add(norm)
    return a


def lgcn_forward(feature: jnp.ndarray, edge_index: jnp.ndarray, K: int = 8,
                 *, tm: int = 256, tn: int = 256) -> jnp.ndarray:
    N, F = feature.shape
    a = _dense_gcn_norm_adj(edge_index, N)

    # Pad N so both tile sizes divide it; padded rows/cols of Â are zero, so
    # real rows are unaffected and padded output rows are sliced off.
    t = math.lcm(tm, tn)
    n_pad = ((N + t - 1) // t) * t
    a_pad = jnp.zeros((n_pad, n_pad), jnp.float32).at[:N, :N].set(a)
    a_pad = a_pad.astype(jnp.bfloat16)          # dominant O(N^2) operand -> bf16
    x_pad = jnp.zeros((n_pad, F), jnp.float32).at[:N, :].set(
        feature.astype(jnp.float32))

    ni = n_pad // tm
    nj = n_pad // tn

    kernel = functools.partial(_lgcn_kernel, tm=tm, tn=tn, n_pad=n_pad, nj=nj)

    # VMEM budget (lane dim padded to 128): double-buffered Â tiles + resident
    # X + ping-pong x_k scratch + accumulator + output block.
    f_pad = ((F + 127) // 128) * 128
    est = (2 * tm * tn * 2              # Â tiles, double-buffered, bf16
           + 2 * n_pad * f_pad * 4      # resident X (double-buffer worst case)
           + 2 * n_pad * f_pad * 4      # x_k ping-pong scratch
           + tm * f_pad * 4             # accumulator
           + 2 * tm * f_pad * 4)        # output block, double-buffered
    vmem_limit = int(min(max(2 * est, 32 * 1024 * 1024), 56 * 1024 * 1024))

    cost = pl.CostEstimate(
        flops=2 * K * n_pad * n_pad * F,
        transcendentals=0,
        bytes_accessed=K * n_pad * n_pad * 2 + n_pad * F * 4 + K * n_pad * F * 4)

    prop = pl.pallas_call(
        kernel,
        out_shape=jax.ShapeDtypeStruct((K, n_pad, F), jnp.float32),
        grid_spec=pltpu.PrefetchScalarGridSpec(
            num_scalar_prefetch=0,
            grid=(K, ni, nj),
            in_specs=[
                pl.BlockSpec((tm, tn), lambda k, i, j: (i, j)),      # Â tiles
                pl.BlockSpec((n_pad, F), lambda k, i, j: (0, 0)),    # X resident
            ],
            out_specs=pl.BlockSpec((1, tm, F), lambda k, i, j: (k, i, 0)),
            scratch_shapes=[
                pltpu.VMEM((2 * n_pad, F), jnp.float32),   # x_k ping-pong
                pltpu.VMEM((tm, F), jnp.float32),          # row-tile accumulator
            ],
        ),
        compiler_params=pltpu.CompilerParams(
            # All axes "arbitrary": layers are sequential and the row /
            # contraction axes share the persistent x_k scratch; a megacore
            # "parallel" split would need x_k to round-trip HBM per layer.
            dimension_semantics=("arbitrary", "arbitrary", "arbitrary"),
            vmem_limit_bytes=vmem_limit,
        ),
        cost_estimate=cost,
    )(a_pad, x_pad)

    prop = prop[:, :N, :]                                       # (K, N, F)
    layers = jnp.concatenate(
        [feature.astype(jnp.float32)[None], prop], axis=0)      # (K+1, N, F)
    # Final [N, (K+1)*F] layout (layer k in columns k*F:(k+1)*F) is produced by
    # XLA layout plumbing so every kernel store stayed lane-offset-0 aligned.
    return jnp.transpose(layers, (1, 0, 2)).reshape(N, (K + 1) * F)


def lgcn_reference(feature: jnp.ndarray, edge_index: jnp.ndarray,
                   K: int = 8) -> jnp.ndarray:
    """Pure-JAX reference with the same Â-in-bf16 quantization as the kernel."""
    N, _ = feature.shape
    a = _dense_gcn_norm_adj(edge_index, N).astype(jnp.bfloat16)
    cur = feature.astype(jnp.float32)
    xs = [cur]
    for _ in range(K):
        cur = jnp.dot(a, cur.astype(jnp.bfloat16),
                      preferred_element_type=jnp.float32)
        xs.append(cur)
    return jnp.concatenate(xs, axis=1)


if __name__ == "__main__":
    key = jax.random.PRNGKey(0)
    N, F, K, E = 512, 32, 8, 4096

    k1, k2, k3 = jax.random.split(key, 3)
    feature = jax.random.normal(k1, (N, F), dtype=jnp.float32)
    src = jax.random.randint(k2, (E,), 0, N, dtype=jnp.int32)
    dst = jax.random.randint(k3, (E,), 0, N, dtype=jnp.int32)
    # symmetrize edges (typical KNN-style undirected graph in scSLAT)
    edge_index = jnp.stack(
        [jnp.concatenate([src, dst]), jnp.concatenate([dst, src])], axis=0)

    out = jax.block_until_ready(lgcn_forward(feature, edge_index, K=K))
    ref = jax.block_until_ready(lgcn_reference(feature, edge_index, K=K))

    assert out.shape == (N, (K + 1) * F), out.shape
    assert jnp.allclose(out, ref, atol=2e-3, rtol=2e-3), float(
        jnp.max(jnp.abs(out - ref)))

    print("KERNEL_OK")
</pallas_src>

<mosaic_0001>
module attributes {stable_mosaic.version = 11 : i64} {
  func.func @_lgcn_kernel(%arg0: i32, %arg1: i32, %arg2: i32, %arg3: memref<256x256xbf16, #tpu.memory_space<vmem>>, %arg4: memref<512x32xf32, #tpu.memory_space<vmem>>, %arg5: memref<1x256x32xf32, #tpu.memory_space<vmem>>, %arg6: memref<1024x32xf32, #tpu.memory_space<vmem>>, %arg7: memref<256x32xf32, #tpu.memory_space<vmem>>) attributes {dimension_semantics = [#tpu.dimension_semantics<arbitrary>, #tpu.dimension_semantics<arbitrary>, #tpu.dimension_semantics<arbitrary>], iteration_bounds = array<i64: 8, 2, 2>, scalar_prefetch = 0 : i64, scratch_operands = 2 : i64, tpu.core_type = #tpu.core_type<tc>, window_params = [{transform_indices = @transform_0, window_bounds = array<i64: 256, 256>}, {pipeline_mode = #tpu.pipeline_mode<synchronous>, transform_indices = @transform_1, window_bounds = array<i64: 512, 32>}, {transform_indices = @transform_2, window_bounds = array<i64: 1, 256, 32>}]} {
    %c0_i32 = arith.constant 0 : i32
    %0 = arith.cmpi eq, %arg0, %c0_i32 : i32
    %c0_i32_0 = arith.constant 0 : i32
    %1 = arith.cmpi eq, %arg1, %c0_i32_0 : i32
    %2 = arith.andi %0, %1 : i1
    %c0_i32_1 = arith.constant 0 : i32
    %3 = arith.cmpi eq, %arg2, %c0_i32_1 : i32
    %4 = arith.andi %2, %3 : i1
    %5 = arith.extui %4 : i1 to i32
    %c0_i32_2 = arith.constant 0 : i32
    %6 = arith.cmpi ne, %5, %c0_i32_2 : i32
    scf.if %6 {
      %c0_24 = arith.constant 0 : index
      %c0_25 = arith.constant 0 : index
      %46 = vector.load %arg4[%c0_24, %c0_25] : memref<512x32xf32, #tpu.memory_space<vmem>>, vector<512x32xf32>
      %c512 = arith.constant 512 : index
      %c0_26 = arith.constant 0 : index
      %47 = vector.load %arg6[%c512, %c0_26] : memref<1024x32xf32, #tpu.memory_space<vmem>>, vector<512x32xf32>
      tpu.vector_store %arg6[%c512, %c0_26], %46 {strides = array<i32>} : memref<1024x32xf32, #tpu.memory_space<vmem>>, vector<512x32xf32>,
    } else {
    }
    %c0_i32_3 = arith.constant 0 : i32
    %7 = arith.cmpi eq, %arg2, %c0_i32_3 : i32
    %8 = arith.extui %7 : i1 to i32
    %c0_i32_4 = arith.constant 0 : i32
    %9 = arith.cmpi ne, %8, %c0_i32_4 : i32
    scf.if %9 {
      %cst_24 = arith.constant 0.000000e+00 : f32
      %46 = vector.broadcast %cst_24 : f32 to vector<256x32xf32>
      %c0_25 = arith.constant 0 : index
      %c0_26 = arith.constant 0 : index
      %47 = vector.load %arg7[%c0_25, %c0_26] : memref<256x32xf32, #tpu.memory_space<vmem>>, vector<256x32xf32>
      tpu.vector_store %arg7[%c0_25, %c0_26], %46 {strides = array<i32>} : memref<256x32xf32, #tpu.memory_space<vmem>>, vector<256x32xf32>,
    } else {
    }
    %c1_i32 = arith.constant 1 : i32
    %10 = arith.addi %arg0, %c1_i32 : i32
    %c2_i32 = arith.constant 2 : i32
    %c0_i32_5 = arith.constant 0 : i32
    %11 = arith.cmpi eq, %c2_i32, %c0_i32_5 : i32
    %c1_i32_6 = arith.constant 1 : i32
    %12 = arith.select %11, %c1_i32_6, %c2_i32 : i32
    %13 = arith.remsi %10, %12 : i32
    %c0_i32_7 = arith.constant 0 : i32
    %14 = arith.cmpi ne, %13, %c0_i32_7 : i32
    %c0_i32_8 = arith.constant 0 : i32
    %15 = arith.cmpi slt, %13, %c0_i32_8 : i32
    %c0_i32_9 = arith.constant 0 : i32
    %16 = arith.cmpi slt, %12, %c0_i32_9 : i32
    %17 = arith.xori %15, %16 : i1
    %18 = arith.andi %17, %14 : i1
    %19 = arith.addi %13, %12 : i32
    %20 = arith.select %18, %19, %13 : i32
    %c2_i32_10 = arith.constant 2 : i32
    %c0_i32_11 = arith.constant 0 : i32
    %21 = arith.cmpi eq, %c2_i32_10, %c0_i32_11 : i32
    %c1_i32_12 = arith.constant 1 : i32
    %22 = arith.select %21, %c1_i32_12, %c2_i32_10 : i32
    %23 = arith.remsi %arg0, %22 : i32
    %c0_i32_13 = arith.constant 0 : i32
    %24 = arith.cmpi ne, %23, %c0_i32_13 : i32
    %c0_i32_14 = arith.constant 0 : i32
    %25 = arith.cmpi slt, %23, %c0_i32_14 : i32
    %c0_i32_15 = arith.constant 0 : i32
    %26 = arith.cmpi slt, %22, %c0_i32_15 : i32
    %27 = arith.xori %25, %26 : i1
    %28 = arith.andi %27, %24 : i1
    %29 = arith.addi %23, %22 : i32
    %30 = arith.select %28, %29, %23 : i32
    %c512_i32 = arith.constant 512 : i32
    %31 = arith.muli %20, %c512_i32 : i32
    %c256_i32 = arith.constant 256 : i32
    %32 = arith.muli %arg2, %c256_i32 : i32
    %33 = arith.addi %31, %32 : i32
    %34 = tpu.assume_multiple %33, 256 : i32
    %35 = arith.index_cast %34 : i32 to index
    %c0 = arith.constant 0 : index
    %36 = vector.load %arg6[%35, %c0] : memref<1024x32xf32, #tpu.memory_space<vmem>>, vector<256x32xf32>
    %c0_16 = arith.constant 0 : index
    %c0_17 = arith.constant 0 : index
    %37 = vector.load %arg7[%c0_16, %c0_17] : memref<256x32xf32, #tpu.memory_space<vmem>>, vector<256x32xf32>
    %c0_18 = arith.constant 0 : index
    %c0_19 = arith.constant 0 : index
    %38 = vector.load %arg3[%c0_18, %c0_19] : memref<256x256xbf16, #tpu.memory_space<vmem>>, vector<256x256xbf16>
    %39 = arith.truncf %36 : vector<256x32xf32> to vector<256x32xbf16>
    %cst = arith.constant dense<0.000000e+00> : vector<256x32xf32>
    %40 = tpu.matmul %38, %39, %cst {dimension_numbers = #tpu.dot_dimension_numbers<[1], [0], [0], [1], [0, 0, 1, 1], [], []>} : vector<256x256xbf16>, vector<256x32xbf16>, vector<256x32xf32> -> vector<256x32xf32>
    %41 = arith.addf %37, %40 : vector<256x32xf32>
    %c0_20 = arith.constant 0 : index
    %c0_21 = arith.constant 0 : index
    %42 = vector.load %arg7[%c0_20, %c0_21] : memref<256x32xf32, #tpu.memory_space<vmem>>, vector<256x32xf32>
    tpu.vector_store %arg7[%c0_20, %c0_21], %41 {strides = array<i32>} : memref<256x32xf32, #tpu.memory_space<vmem>>, vector<256x32xf32>,
    %c1_i32_22 = arith.constant 1 : i32
    %43 = arith.cmpi eq, %arg2, %c1_i32_22 : i32
    %44 = arith.extui %43 : i1 to i32
    %c0_i32_23 = arith.constant 0 : i32
    %45 = arith.cmpi ne, %44, %c0_i32_23 : i32
    scf.if %45 {
      %c0_24 = arith.constant 0 : index
      %c0_25 = arith.constant 0 : index
      %46 = vector.load %arg7[%c0_24, %c0_25] : memref<256x32xf32, #tpu.memory_space<vmem>>, vector<256x32xf32>
      %c0_26 = arith.constant 0 : index
      %c0_27 = arith.constant 0 : index
      %c0_28 = arith.constant 0 : index
      %47 = vector.load %arg5[%c0_26, %c0_27, %c0_28] : memref<1x256x32xf32, #tpu.memory_space<vmem>>, vector<1x256x32xf32>
      %48 = vector.shape_cast %47 : vector<1x256x32xf32> to vector<256x32xf32>
      %49 = vector.shape_cast %46 : vector<256x32xf32> to vector<1x256x32xf32>
      tpu.vector_store %arg5[%c0_26, %c0_27, %c0_28], %49 {strides = array<i32>} : memref<1x256x32xf32, #tpu.memory_space<vmem>>, vector<1x256x32xf32>,
      %c512_i32_29 = arith.constant 512 : i32
      %50 = arith.muli %30, %c512_i32_29 : i32
      %c256_i32_30 = arith.constant 256 : i32
      %51 = arith.muli %arg1, %c256_i32_30 : i32
      %52 = arith.addi %50, %51 : i32
      %53 = tpu.assume_multiple %52, 256 : i32
      %54 = arith.index_cast %53 : i32 to index
      %c0_31 = arith.constant 0 : index
      %55 = vector.load %arg6[%54, %c0_31] : memref<1024x32xf32, #tpu.memory_space<vmem>>, vector<256x32xf32>
      tpu.vector_store %arg6[%54, %c0_31], %46 {strides = array<i32>} : memref<1024x32xf32, #tpu.memory_space<vmem>>, vector<256x32xf32>,
    } else {
    }
    return
  }
  func.func @transform_0(%arg0: i32, %arg1: i32, %arg2: i32) -> (i32, i32) {
    %c0_i32 = arith.constant 0 : i32
    return %arg1, %arg2 : i32, i32
  }
  func.func @transform_1(%arg0: i32, %arg1: i32, %arg2: i32) -> (i32, i32) {
    %c0_i32 = arith.constant 0 : i32
    %c0_i32_0 = arith.constant 0 : i32
    %c0_i32_1 = arith.constant 0 : i32
    return %c0_i32, %c0_i32_0 : i32, i32
  }
  func.func @transform_2(%arg0: i32, %arg1: i32, %arg2: i32) -> (i32, i32, i32) {
    %c0_i32 = arith.constant 0 : i32
    %c0_i32_0 = arith.constant 0 : i32
    return %arg0, %arg1, %c0_i32 : i32, i32, i32
  }
}

</mosaic_0001>

<llo_original>
// kernel: tpu_custom_call.1
$region0: #{tpu_custom_call.1}
  #allocation0 [shape = 'u32[]', space=smem, size = 0x4, offset = 0x4, fixed_abs, tag = 'smem constant byte address 0x4 - core index']
  #allocation1 [shape = 'u32[144,128]{1,0:T(1,128)}', space=vmem, size = 0x12000, scoped, tag = 'internal scratch']
  #allocation2 [shape = 'f32[1024,32]{1,0:T(8,128)}', space=vmem, size = 0x80000, scoped, tag = 'scratch operand']
  #allocation3 [shape = 'f32[256,32]{1,0:T(8,128)}', space=vmem, size = 0x20000, scoped, tag = 'scratch operand']
  %s0 = inlined_call_operand.hbm [shape: bf16[512,512], index: 0, kind: input, shape index: {}]
  %s1 = inlined_call_operand.vmem [shape: f32[512,32], index: 1, kind: input, shape index: {}]
  %s2 = inlined_call_operand.vmem [shape: f32[8,512,32], index: 2, kind: output, shape index: {}]
  %s3 = sld [smem:[#allocation0]]
  $region57: #{tpu_custom_call.1} parent=0
    _
  %s5 = ssub.s32 1, %s3
  %s6 = scalar_select 0, %s5, %s3
  $region1: #{tpu_custom_call.1} parent=0
    #allocation4 [shape = 'u8[262144]{0}', space=vmem, size = 0x40000, scoped, tag = 'input window, operand 0']
    #allocation5 [shape = 's32[2]{0}', space=sflag, size = 0x8, scoped, tag = 'scoped memory for tpu_custom_call.1']
    %7 = vsyncpa [#allocation5], 0
    %s8 = scalar_lea.sflag [#allocation5], 1
    %9 = vsyncpa %s8, 0
    loop: start=0, step=1, limit=34
    $region2: #{tpu_custom_call.1} parent=1 // loop_pre_header
      _
    $region3: #{tpu_custom_call.1} parent=1 // loop_header
      %s11 = sphi 0, %s15
      %p12 = scmp.ge.s32.totalorder %s11, 34
      %s18 = sphi 0, %s37
      %s19 = sphi 0, %s33
      %s20 = sphi 0, %s29
      %s21 = sphi 0, %s18
      %s22 = sphi 0, %s19
      %s23 = sphi 0, %s20
      %s24 = sphi 0, %s21
      %s25 = sphi 0, %s22
      %s26 = sphi 0, %s23
      %s42 = sphi 0, %s44
      %s45 = sphi 0, %s42
      %s46 = sphi 0, %s45
      %s62 = sphi 0, %s46
      %s66 = sphi 0, %s66
      %s68 = sphi 0, %s66
      %s69 = sphi 0, %s68
      %s83 = sphi 0, %s69
      %s91 = sphi 0, %s93
      %s94 = sphi 0, %s91
      %s95 = sphi 0, %s94
      %s111 = sphi 0, %s95
    $region4: #{tpu_custom_call.1} parent=1 // loop_header_branch
      %14 = sbr.rel (%p12) target = $region8
    $region5: #{tpu_custom_call.1} parent=1 // loop_body
      %s16 = ssub.s32 %s11, 1
      %s17 = ssub.s32 %s11, 2
      %s27 = sadd.s32 1, %s20
      %p28 = scmp.ge.s32.totalorder %s27, 2
      %s29 = scalar_select %p28, 0, %s27
      %s30 = sadd.s32 1, %s19
      %s31 = scalar_select %p28, %s30, %s19
      %p32 = scmp.ge.s32.totalorder %s31, 2
      %s33 = scalar_select %p32, 0, %s31
      %s34 = sadd.s32 1, %s18
      %s35 = scalar_select %p32, %s34, %s18
      %p36 = scmp.ge.s32.totalorder %s35, 8
      %s37 = scalar_select %p36, 0, %s35
      %s38 = ssub.s32 %s19, %s33
      %s39 = ssub.s32 %s20, %s29
      %s40 = sor.u32 %s38, %s39
      %p41 = scmp.eq.s32.totalorder %s40, 0
      %s43 = sadd.s32 %s42, 1
      %s44 = scalar_select %p41, %s42, %s43
      %p47 = pneg %p41
      %p48 = scmp.eq.s32.totalorder %s11, 31
      %p49 = por %p47, %p48
      %p50 = scmp.ne.s32.totalorder %s42, %s45
      %p51 = scmp.eq.s32.totalorder %s11, 0
      %p52 = por %p50, %p51
      %p53 = scmp.ne.s32.totalorder %s42, %s45
      %p54 = scmp.eq.s32.totalorder %s16, 31
      %p55 = por %p53, %p54
      %p56 = scmp.ne.s32.totalorder %s45, %s46
      %p57 = scmp.eq.s32.totalorder %s16, 0
      %p58 = por %p56, %p57
      %p59 = scmp.ne.s32.totalorder %s45, %s46
      %p60 = scmp.eq.s32.totalorder %s17, 31
      %p61 = por %p59, %p60
      %p63 = scmp.ne.s32.totalorder %s46, %s62
      %p64 = scmp.eq.s32.totalorder %s17, 0
      %p65 = por %p63, %p64
      %s67 = sadd.s32 %s66, 1
      %p70 = scmp.eq.s32.totalorder %s11, 31
      %p71 = scmp.ne.s32.totalorder %s66, %s68
      %p72 = scmp.eq.s32.totalorder %s11, 0
      %p73 = por %p71, %p72
      %p74 = scmp.ne.s32.totalorder %s66, %s68
      %p75 = scmp.eq.s32.totalorder %s16, 31
      %p76 = por %p74, %p75
      %p77 = scmp.ne.s32.totalorder %s68, %s69
      %p78 = scmp.eq.s32.totalorder %s16, 0
      %p79 = por %p77, %p78
      %p80 = scmp.ne.s32.totalorder %s68, %s69
      %p81 = scmp.eq.s32.totalorder %s17, 31
      %p82 = por %p80, %p81
      %p84 = scmp.ne.s32.totalorder %s69, %s83
      %p85 = scmp.eq.s32.totalorder %s17, 0
      %p86 = por %p84, %p85
      %s87 = ssub.s32 %s18, %s37
      %s88 = ssub.s32 %s19, %s33
      %s89 = sor.u32 %s87, %s88
      %p90 = scmp.eq.s32.totalorder %s89, 0
      %s92 = sadd.s32 %s91, 1
      %s93 = scalar_select %p90, %s91, %s92
      %p96 = pneg %p90
      %p97 = scmp.eq.s32.totalorder %s11, 31
      %p98 = por %p96, %p97
      %p99 = scmp.ne.s32.totalorder %s91, %s94
      %p100 = scmp.eq.s32.totalorder %s11, 0
      %p101 = por %p99, %p100
      %p102 = scmp.ne.s32.totalorder %s91, %s94
      %p103 = scmp.eq.s32.totalorder %s16, 31
      %p104 = por %p102, %p103
      %p105 = scmp.ne.s32.totalorder %s94, %s95
      %p106 = scmp.eq.s32.totalorder %s16, 0
      %p107 = por %p105, %p106
      %p108 = scmp.ne.s32.totalorder %s94, %s95
      %p109 = scmp.eq.s32.totalorder %s17, 31
      %p110 = por %p108, %p109
      %p112 = scmp.ne.s32.totalorder %s95, %s111
      %p113 = scmp.eq.s32.totalorder %s17, 0
      %p114 = por %p112, %p113
      %p115 = scmp.le.s32.totalorder 1, %s11
      %p116 = scmp.lt.s32.totalorder %s11, 33
      %p117 = pnand %p115, %p116
      %p118 = pneg %p117
      // Predicated region
      $region9: #{tpu_custom_call.1} parent=5 // pred_check
        _
      $region10: #{tpu_custom_call.1} parent=5 // pred_check_branch
        %120 = sbr.rel (%p117) target = $region12
      $region11: #{tpu_custom_call.1} parent=5 // pred_region
        %s121 = ssub.s32 %s11, 1
        // Predicated region
        $region13: #{tpu_custom_call.1} parent=11 // pred_check
          %p122 = pneg %p79
        $region14: #{tpu_custom_call.1} parent=11 // pred_check_branch
          %124 = sbr.rel (%p122) target = $region16
        $region15: #{tpu_custom_call.1} parent=11 // pred_region
          _
        $region16: #{tpu_custom_call.1} parent=11 // pred_fallthru
          _
      $region12: #{tpu_custom_call.1} parent=5 // pred_fallthru
        _
      %p125 = scmp.lt.s32.totalorder %s11, 32
      // Predicated region
      $region17: #{tpu_custom_call.1} parent=5 // pred_check
        %p126 = pneg %p125
      $region18: #{tpu_custom_call.1} parent=5 // pred_check_branch
        %128 = sbr.rel (%p126) target = $region20
      $region19: #{tpu_custom_call.1} parent=5 // pred_region
        // Predicated region
        $region21: #{tpu_custom_call.1} parent=19 // pred_check
          %p129 = pneg %p52
        $region22: #{tpu_custom_call.1} parent=19 // pred_check_branch
          %131 = sbr.rel (%p129) target = $region24
        $region23: #{tpu_custom_call.1} parent=19 // pred_region
          %s132 = sand.u32 %s42, 1
          %s133 = scalar_lea.sflag [#allocation5], %s132
          %s134 = sand.u32 %s42, 1
          %s135 = smul.addr %s134, 256
          %s136 = scalar_lea.vmem [#allocation4], %s135
          %s137 = smul.u32 32, %s19
          %s138 = smul.u32 2, %s20
          %s140 = ssub.s32 4096, 4096
          %141 = vsyncadd %s133, %s140
          %s142 = smul.addr %s137, 4
          %s143 = sadd.s32 %s138, %s142
          %s144 = smul.addr %s143, 64
          %s145 = scalar_lea.hbm %s0, %s144
          %s146 = sshll.u32 %s136, 4
          %s147 = int_to_ptr.vmem [resolvable:$true] %s146
          %152 = dma.hbm_to_vmem [thread:$0]  %s145, 4096, %s147, %s133, 256, 128, 8
        $region24: #{tpu_custom_call.1} parent=19 // pred_fallthru
          _
      $region20: #{tpu_custom_call.1} parent=5 // pred_fallthru
        _
      %p153 = scmp.le.s32.totalorder 1, %s11
      %p154 = scmp.lt.s32.totalorder %s11, 33
      %p155 = pnand %p153, %p154
      %p156 = pneg %p155
      // Predicated region
      $region25: #{tpu_custom_call.1} parent=5 // pred_check
        _
      $region26: #{tpu_custom_call.1} parent=5 // pred_check_branch
        %158 = sbr.rel (%p155) target = $region28
      $region27: #{tpu_custom_call.1} parent=5 // pred_region
        %s159 = ssub.s32 %s11, 1
        %s160 = sand.u32 %s45, 1
        %s161 = scalar_lea.sflag [#allocation5], %s160
        %s162 = sand.u32 %s45, 1
        %s163 = smul.addr %s162, 256
        %s164 = scalar_lea.vmem [#allocation4], %s163
        // Predicated region
        $region29: #{tpu_custom_call.1} parent=27 // pred_check
          %p165 = pneg %p58
        $region30: #{tpu_custom_call.1} parent=27 // pred_check_branch
          %167 = sbr.rel (%p165) target = $region32
        $region31: #{tpu_custom_call.1} parent=27 // pred_region
          %168 = dma.done %s161, 4096
        $region32: #{tpu_custom_call.1} parent=27 // pred_fallthru
          _
        %s169 = sand.u32 %s45, 1
        %s170 = scalar_lea.sflag [#allocation5], %s169
        %s171 = sand.u32 %s45, 1
        %s172 = smul.addr %s171, 256
        %s173 = scalar_lea.vmem [#allocation4], %s172
        %p174 = pneg %p58
        %p175 = pneg %p55
        %p176 = pneg %p79
        %p177 = pneg %p76
        %p178 = pneg %p107
        %p179 = pneg %p104
        %s180 = smul.u32 32, %s22
        %p181 = scmp.lt.s32.totalorder %s21, 7
        %s182 = scalar_select %p181, %s21, 7
        %p183 = scmp.lt.s32.totalorder %s180, 63
        %s184 = scalar_select %p183, %s180, 63
        %s185 = smul.addr %s182, 64
        %s186 = sadd.s32 %s184, %s185
        %s187 = smul.addr %s186, 8
        %s188 = scalar_lea.vmem %s2, %s187
        %s189 = smul.u32 32, %s22
        %s190 = smul.u32 2, %s23
        %s191 = smul.u32 32, %s22
        %p192 = scmp.lt.s32.totalorder %s21, 7
        %s193 = scalar_select %p192, %s21, 7
        %p194 = scmp.lt.s32.totalorder %s191, 63
        %s195 = scalar_select %p194, %s191, 63
        %s196 = smul.addr %s193, 64
        %s197 = sadd.s32 %s195, %s196
        %s198 = smul.addr %s197, 8
        %s199 = scalar_lea.vmem %s2, %s198
        %s200 = smul.u32 32, %s22
        %p202 = scmp.eq.s32.totalorder %s21, 0
        %p203 = scmp.eq.s32.totalorder %s22, 0
        %p204 = pnand %p202, %p203
        %p205 = pneg %p204
        %p206 = scmp.eq.s32.totalorder %s23, 0
        %p207 = pnand %p205, %p206
        %p208 = pneg %p207
        // Predicated region
        $region33: #{tpu_custom_call.1} parent=27 // pred_check
          _
        $region34: #{tpu_custom_call.1} parent=27 // pred_check_branch
          %210 = sbr.rel (%p207) target = $region36
        $region35: #{tpu_custom_call.1} parent=27 // pred_region
          %v211 = vld [vmem:[%s1] sm:$0xff]
          %v212 = vld [vmem:[%s1 + $0x8] sm:$0xff]
          %v213 = vld [vmem:[%s1 + $0x10] sm:$0xff]
          %v214 = vld [vmem:[%s1 + $0x18] sm:$0xff]
          %v215 = vld [vmem:[%s1 + $0x20] sm:$0xff]
          %v216 = vld [vmem:[%s1 + $0x28] sm:$0xff]
          %v217 = vld [vmem:[%s1 + $0x30] sm:$0xff]
          %v218 = vld [vmem:[%s1 + $0x38] sm:$0xff]
          %v219 = vld [vmem:[%s1 + $0x40] sm:$0xff]
          %v220 = vld [vmem:[%s1 + $0x48] sm:$0xff]
          %v221 = vld [vmem:[%s1 + $0x50] sm:$0xff]
          %v222 = vld [vmem:[%s1 + $0x58] sm:$0xff]
          %v223 = vld [vmem:[%s1 + $0x60] sm:$0xff]
          %v224 = vld [vmem:[%s1 + $0x68] sm:$0xff]
          %v225 = vld [vmem:[%s1 + $0x70] sm:$0xff]
          %v226 = vld [vmem:[%s1 + $0x78] sm:$0xff]
          %v227 = vld [vmem:[%s1 + $0x80] sm:$0xff]
          %v228 = vld [vmem:[%s1 + $0x88] sm:$0xff]
          %v229 = vld [vmem:[%s1 + $0x90] sm:$0xff]
          %v230 = vld [vmem:[%s1 + $0x98] sm:$0xff]
          %v231 = vld [vmem:[%s1 + $0xa0] sm:$0xff]
          %v232 = vld [vmem:[%s1 + $0xa8] sm:$0xff]
          %v233 = vld [vmem:[%s1 + $0xb0] sm:$0xff]
          %v234 = vld [vmem:[%s1 + $0xb8] sm:$0xff]
          %v235 = vld [vmem:[%s1 + $0xc0] sm:$0xff]
          %v236 = vld [vmem:[%s1 + $0xc8] sm:$0xff]
          %v237 = vld [vmem:[%s1 + $0xd0] sm:$0xff]
          %v238 = vld [vmem:[%s1 + $0xd8] sm:$0xff]
          %v239 = vld [vmem:[%s1 + $0xe0] sm:$0xff]
          %v240 = vld [vmem:[%s1 + $0xe8] sm:$0xff]
          %v241 = vld [vmem:[%s1 + $0xf0] sm:$0xff]
          %v242 = vld [vmem:[%s1 + $0xf8] sm:$0xff]
          %v243 = vld [vmem:[%s1 + $0x100] sm:$0xff]
          %v244 = vld [vmem:[%s1 + $0x108] sm:$0xff]
          %v245 = vld [vmem:[%s1 + $0x110] sm:$0xff]
          %v246 = vld [vmem:[%s1 + $0x118] sm:$0xff]
          %v247 = vld [vmem:[%s1 + $0x120] sm:$0xff]
          %v248 = vld [vmem:[%s1 + $0x128] sm:$0xff]
          %v249 = vld [vmem:[%s1 + $0x130] sm:$0xff]
          %v250 = vld [vmem:[%s1 + $0x138] sm:$0xff]
          %v251 = vld [vmem:[%s1 + $0x140] sm:$0xff]
          %v252 = vld [vmem:[%s1 + $0x148] sm:$0xff]
          %v253 = vld [vmem:[%s1 + $0x150] sm:$0xff]
          %v254 = vld [vmem:[%s1 + $0x158] sm:$0xff]
          %v255 = vld [vmem:[%s1 + $0x160] sm:$0xff]
          %v256 = vld [vmem:[%s1 + $0x168] sm:$0xff]
          %v257 = vld [vmem:[%s1 + $0x170] sm:$0xff]
          %v258 = vld [vmem:[%s1 + $0x178] sm:$0xff]
          %v259 = vld [vmem:[%s1 + $0x180] sm:$0xff]
          %v260 = vld [vmem:[%s1 + $0x188] sm:$0xff]
          %v261 = vld [vmem:[%s1 + $0x190] sm:$0xff]
          %v262 = vld [vmem:[%s1 + $0x198] sm:$0xff]
          %v263 = vld [vmem:[%s1 + $0x1a0] sm:$0xff]
          %v264 = vld [vmem:[%s1 + $0x1a8] sm:$0xff]
          %v265 = vld [vmem:[%s1 + $0x1b0] sm:$0xff]
          %v266 = vld [vmem:[%s1 + $0x1b8] sm:$0xff]
          %v267 = vld [vmem:[%s1 + $0x1c0] sm:$0xff]
          %v268 = vld [vmem:[%s1 + $0x1c8] sm:$0xff]
          %v269 = vld [vmem:[%s1 + $0x1d0] sm:$0xff]
          %v270 = vld [vmem:[%s1 + $0x1d8] sm:$0xff]
          %v271 = vld [vmem:[%s1 + $0x1e0] sm:$0xff]
          %v272 = vld [vmem:[%s1 + $0x1e8] sm:$0xff]
          %v273 = vld [vmem:[%s1 + $0x1f0] sm:$0xff]
          %v274 = vld [vmem:[%s1 + $0x1f8] sm:$0xff]
          %vm275 = vcmask 261120
          %276 = vst.msk [vmem:[#allocation2 + $0x200] sm:$0xff] %vm275, %v211
          %277 = vst.msk [vmem:[#allocation2 + $0x208] sm:$0xff] %vm275, %v212
          %278 = vst.msk [vmem:[#allocation2 + $0x210] sm:$0xff] %vm275, %v213
          %279 = vst.msk [vmem:[#allocation2 + $0x218] sm:$0xff] %vm275, %v214
          %280 = vst.msk [vmem:[#allocation2 + $0x220] sm:$0xff] %vm275, %v215
          %281 = vst.msk [vmem:[#allocation2 + $0x228] sm:$0xff] %vm275, %v216
          %282 = vst.msk [vmem:[#allocation2 + $0x230] sm:$0xff] %vm275, %v217
          %283 = vst.msk [vmem:[#allocation2 + $0x238] sm:$0xff] %vm275, %v218
          %284 = vst.msk [vmem:[#allocation2 + $0x240] sm:$0xff] %vm275, %v219
          %285 = vst.msk [vmem:[#allocation2 + $0x248] sm:$0xff] %vm275, %v220
          %286 = vst.msk [vmem:[#allocation2 + $0x250] sm:$0xff] %vm275, %v221
          %287 = vst.msk [vmem:[#allocation2 + $0x258] sm:$0xff] %vm275, %v222
          %288 = vst.msk [vmem:[#allocation2 + $0x260] sm:$0xff] %vm275, %v223
          %289 = vst.msk [vmem:[#allocation2 + $0x268] sm:$0xff] %vm275, %v224
          %290 = vst.msk [vmem:[#allocation2 + $0x270] sm:$0xff] %vm275, %v225
          %291 = vst.msk [vmem:[#allocation2 + $0x278] sm:$0xff] %vm275, %v226
          %292 = vst.msk [vmem:[#allocation2 + $0x280] sm:$0xff] %vm275, %v227
          %293 = vst.msk [vmem:[#allocation2 + $0x288] sm:$0xff] %vm275, %v228
          %294 = vst.msk [vmem:[#allocation2 + $0x290] sm:$0xff] %vm275, %v229
          %295 = vst.msk [vmem:[#allocation2 + $0x298] sm:$0xff] %vm275, %v230
          %296 = vst.msk [vmem:[#allocation2 + $0x2a0] sm:$0xff] %vm275, %v231
          %297 = vst.msk [vmem:[#allocation2 + $0x2a8] sm:$0xff] %vm275, %v232
          %298 = vst.msk [vmem:[#allocation2 + $0x2b0] sm:$0xff] %vm275, %v233
          %299 = vst.msk [vmem:[#allocation2 + $0x2b8] sm:$0xff] %vm275, %v234
          %300 = vst.msk [vmem:[#allocation2 + $0x2c0] sm:$0xff] %vm275, %v235
          %301 = vst.msk [vmem:[#allocation2 + $0x2c8] sm:$0xff] %vm275, %v236
          %302 = vst.msk [vmem:[#allocation2 + $0x2d0] sm:$0xff] %vm275, %v237
          %303 = vst.msk [vmem:[#allocation2 + $0x2d8] sm:$0xff] %vm275, %v238
          %304 = vst.msk [vmem:[#allocation2 + $0x2e0] sm:$0xff] %vm275, %v239
          %305 = vst.msk [vmem:[#allocation2 + $0x2e8] sm:$0xff] %vm275, %v240
          %306 = vst.msk [vmem:[#allocation2 + $0x2f0] sm:$0xff] %vm275, %v241
          %307 = vst.msk [vmem:[#allocation2 + $0x2f8] sm:$0xff] %vm275, %v242
          %308 = vst.msk [vmem:[#allocation2 + $0x300] sm:$0xff] %vm275, %v243
          %309 = vst.msk [vmem:[#allocation2 + $0x308] sm:$0xff] %vm275, %v244
          %310 = vst.msk [vmem:[#allocation2 + $0x310] sm:$0xff] %vm275, %v245
          %311 = vst.msk [vmem:[#allocation2 + $0x318] sm:$0xff] %vm275, %v246
          %312 = vst.msk [vmem:[#allocation2 + $0x320] sm:$0xff] %vm275, %v247
          %313 = vst.msk [vmem:[#allocation2 + $0x328] sm:$0xff] %vm275, %v248
          %314 = vst.msk [vmem:[#allocation2 + $0x330] sm:$0xff] %vm275, %v249
          %315 = vst.msk [vmem:[#allocation2 + $0x338] sm:$0xff] %vm275, %v250
          %316 = vst.msk [vmem:[#allocation2 + $0x340] sm:$0xff] %vm275, %v251
          %317 = vst.msk [vmem:[#allocation2 + $0x348] sm:$0xff] %vm275, %v252
          %318 = vst.msk [vmem:[#allocation2 + $0x350] sm:$0xff] %vm275, %v253
          %319 = vst.msk [vmem:[#allocation2 + $0x358] sm:$0xff] %vm275, %v254
          %320 = vst.msk [vmem:[#allocation2 + $0x360] sm:$0xff] %vm275, %v255
          %321 = vst.msk [vmem:[#allocation2 + $0x368] sm:$0xff] %vm275, %v256
          %322 = vst.msk [vmem:[#allocation2 + $0x370] sm:$0xff] %vm275, %v257
          %323 = vst.msk [vmem:[#allocation2 + $0x378] sm:$0xff] %vm275, %v258
          %324 = vst.msk [vmem:[#allocation2 + $0x380] sm:$0xff] %vm275, %v259
          %325 = vst.msk [vmem:[#allocation2 + $0x388] sm:$0xff] %vm275, %v260
          %326 = vst.msk [vmem:[#allocation2 + $0x390] sm:$0xff] %vm275, %v261
          %327 = vst.msk [vmem:[#allocation2 + $0x398] sm:$0xff] %vm275, %v262
          %328 = vst.msk [vmem:[#allocation2 + $0x3a0] sm:$0xff] %vm275, %v263
          %329 = vst.msk [vmem:[#allocation2 + $0x3a8] sm:$0xff] %vm275, %v264
          %330 = vst.msk [vmem:[#allocation2 + $0x3b0] sm:$0xff] %vm275, %v265
          %331 = vst.msk [vmem:[#allocation2 + $0x3b8] sm:$0xff] %vm275, %v266
          %332 = vst.msk [vmem:[#allocation2 + $0x3c0] sm:$0xff] %vm275, %v267
          %333 = vst.msk [vmem:[#allocation2 + $0x3c8] sm:$0xff] %vm275, %v268
          %334 = vst.msk [vmem:[#allocation2 + $0x3d0] sm:$0xff] %vm275, %v269
          %335 = vst.msk [vmem:[#allocation2 + $0x3d8] sm:$0xff] %vm275, %v270
          %336 = vst.msk [vmem:[#allocation2 + $0x3e0] sm:$0xff] %vm275, %v271
          %337 = vst.msk [vmem:[#allocation2 + $0x3e8] sm:$0xff] %vm275, %v272
          %338 = vst.msk [vmem:[#allocation2 + $0x3f0] sm:$0xff] %vm275, %v273
          %339 = vst.msk [vmem:[#allocation2 + $0x3f8] sm:$0xff] %vm275, %v274
        $region36: #{tpu_custom_call.1} parent=27 // pred_fallthru
          _
        // Predicated region
        $region37: #{tpu_custom_call.1} parent=27 // pred_check
          %p340 = pneg %p206
        $region38: #{tpu_custom_call.1} parent=27 // pred_check_branch
          %342 = sbr.rel (%p340) target = $region40
        $region39: #{tpu_custom_call.1} parent=27 // pred_region
          %vm343 = vcmask 261120
          %344 = vst.msk [vmem:[#allocation3] sm:$0xff] %vm343, 0.0
          %345 = vst.msk [vmem:[#allocation3 + $0x8] sm:$0xff] %vm343, 0.0
          %346 = vst.msk [vmem:[#allocation3 + $0x10] sm:$0xff] %vm343, 0.0
          %347 = vst.msk [vmem:[#allocation3 + $0x18] sm:$0xff] %vm343, 0.0
          %348 = vst.msk [vmem:[#allocation3 + $0x20] sm:$0xff] %vm343, 0.0
          %349 = vst.msk [vmem:[#allocation3 + $0x28] sm:$0xff] %vm343, 0.0
          %350 = vst.msk [vmem:[#allocation3 + $0x30] sm:$0xff] %vm343, 0.0
          %351 = vst.msk [vmem:[#allocation3 + $0x38] sm:$0xff] %vm343, 0.0
          %352 = vst.msk [vmem:[#allocation3 + $0x40] sm:$0xff] %vm343, 0.0
          %353 = vst.msk [vmem:[#allocation3 + $0x48] sm:$0xff] %vm343, 0.0
          %354 = vst.msk [vmem:[#allocation3 + $0x50] sm:$0xff] %vm343, 0.0
          %355 = vst.msk [vmem:[#allocation3 + $0x58] sm:$0xff] %vm343, 0.0
          %356 = vst.msk [vmem:[#allocation3 + $0x60] sm:$0xff] %vm343, 0.0
          %357 = vst.msk [vmem:[#allocation3 + $0x68] sm:$0xff] %vm343, 0.0
          %358 = vst.msk [vmem:[#allocation3 + $0x70] sm:$0xff] %vm343, 0.0
          %359 = vst.msk [vmem:[#allocation3 + $0x78] sm:$0xff] %vm343, 0.0
          %360 = vst.msk [vmem:[#allocation3 + $0x80] sm:$0xff] %vm343, 0.0
          %361 = vst.msk [vmem:[#allocation3 + $0x88] sm:$0xff] %vm343, 0.0
          %362 = vst.msk [vmem:[#allocation3 + $0x90] sm:$0xff] %vm343, 0.0
          %363 = vst.msk [vmem:[#allocation3 + $0x98] sm:$0xff] %vm343, 0.0
          %364 = vst.msk [vmem:[#allocation3 + $0xa0] sm:$0xff] %vm343, 0.0
          %365 = vst.msk [vmem:[#allocation3 + $0xa8] sm:$0xff] %vm343, 0.0
          %366 = vst.msk [vmem:[#allocation3 + $0xb0] sm:$0xff] %vm343, 0.0
          %367 = vst.msk [vmem:[#allocation3 + $0xb8] sm:$0xff] %vm343, 0.0
          %368 = vst.msk [vmem:[#allocation3 + $0xc0] sm:$0xff] %vm343, 0.0
          %369 = vst.msk [vmem:[#allocation3 + $0xc8] sm:$0xff] %vm343, 0.0
          %370 = vst.msk [vmem:[#allocation3 + $0xd0] sm:$0xff] %vm343, 0.0
          %371 = vst.msk [vmem:[#allocation3 + $0xd8] sm:$0xff] %vm343, 0.0
          %372 = vst.msk [vmem:[#allocation3 + $0xe0] sm:$0xff] %vm343, 0.0
          %373 = vst.msk [vmem:[#allocation3 + $0xe8] sm:$0xff] %vm343, 0.0
          %374 = vst.msk [vmem:[#allocation3 + $0xf0] sm:$0xff] %vm343, 0.0
          %375 = vst.msk [vmem:[#allocation3 + $0xf8] sm:$0xff] %vm343, 0.0
        $region40: #{tpu_custom_call.1} parent=27 // pred_fallthru
          _
        %s376 = sadd.s32 %s21, 1
        %p377 = scmp.lt.s32.totalorder %s376, 0
        %s378 = ssub.s32 0, %s376
        %s379 = scalar_select %p377, %s378, %s376
        %s380 = sand.u32 %s379, 1
        %s381 = ssub.s32 0, %s380
        %s382 = scalar_select %p377, %s381, %s380
        %p383 = scmp.ne.s32.totalorder %s382, 0
        %p384 = scmp.lt.s32.totalorder %s382, 0
        %p385 = pnand %p384, %p383
        %p386 = pneg %p385
        %s387 = sadd.s32 %s382, 2
        %s388 = scalar_select %p386, %s387, %s382
        %p389 = scmp.lt.s32.totalorder %s21, 0
        %s390 = ssub.s32 0, %s21
        %s391 = scalar_select %p389, %s390, %s21
        %s392 = sand.u32 %s391, 1
        %s393 = ssub.s32 0, %s392
        %s394 = scalar_select %p389, %s393, %s392
        %p395 = scmp.ne.s32.totalorder %s394, 0
        %p396 = scmp.lt.s32.totalorder %s394, 0
        %p397 = pnand %p396, %p395
        %p398 = pneg %p397
        %s399 = sadd.s32 %s394, 2
        %s400 = scalar_select %p398, %s399, %s394
        %s401 = smul.u32 %s388, 512
        %s402 = smul.u32 %s23, 256
        %s403 = sadd.s32 %s401, %s402
        %s404 = scalar_lea.vmem [#allocation2], %s403
        %v405 = vld [vmem:[%s404] sm:$0xff]
        %v406 = vld [vmem:[%s404 + $0x8] sm:$0xff]
        %v407 = vld [vmem:[%s404 + $0x10] sm:$0xff]
        %v408 = vld [vmem:[%s404 + $0x18] sm:$0xff]
        %v409 = vld [vmem:[%s404 + $0x20] sm:$0xff]
        %v410 = vld [vmem:[%s404 + $0x28] sm:$0xff]
        %v411 = vld [vmem:[%s404 + $0x30] sm:$0xff]
        %v412 = vld [vmem:[%s404 + $0x38] sm:$0xff]
        %v413 = vld [vmem:[%s404 + $0x40] sm:$0xff]
        %v414 = vld [vmem:[%s404 + $0x48] sm:$0xff]
        %v415 = vld [vmem:[%s404 + $0x50] sm:$0xff]
        %v416 = vld [vmem:[%s404 + $0x58] sm:$0xff]
        %v417 = vld [vmem:[%s404 + $0x60] sm:$0xff]
        %v418 = vld [vmem:[%s404 + $0x68] sm:$0xff]
        %v419 = vld [vmem:[%s404 + $0x70] sm:$0xff]
        %v420 = vld [vmem:[%s404 + $0x78] sm:$0xff]
        %v421 = vld [vmem:[%s404 + $0x80] sm:$0xff]
        %v422 = vld [vmem:[%s404 + $0x88] sm:$0xff]
        %v423 = vld [vmem:[%s404 + $0x90] sm:$0xff]
        %v424 = vld [vmem:[%s404 + $0x98] sm:$0xff]
        %v425 = vld [vmem:[%s404 + $0xa0] sm:$0xff]
        %v426 = vld [vmem:[%s404 + $0xa8] sm:$0xff]
        %v427 = vld [vmem:[%s404 + $0xb0] sm:$0xff]
        %v428 = vld [vmem:[%s404 + $0xb8] sm:$0xff]
        %v429 = vld [vmem:[%s404 + $0xc0] sm:$0xff]
        %v430 = vld [vmem:[%s404 + $0xc8] sm:$0xff]
        %v431 = vld [vmem:[%s404 + $0xd0] sm:$0xff]
        %v432 = vld [vmem:[%s404 + $0xd8] sm:$0xff]
        %v433 = vld [vmem:[%s404 + $0xe0] sm:$0xff]
        %v434 = vld [vmem:[%s404 + $0xe8] sm:$0xff]
        %v435 = vld [vmem:[%s404 + $0xf0] sm:$0xff]
        %v436 = vld [vmem:[%s404 + $0xf8] sm:$0xff]
        %v437 = vld [vmem:[#allocation3] sm:$0xff]
        %v438 = vld [vmem:[#allocation3 + $0x8] sm:$0xff]
        %v439 = vld [vmem:[#allocation3 + $0x10] sm:$0xff]
        %v440 = vld [vmem:[#allocation3 + $0x18] sm:$0xff]
        %v441 = vld [vmem:[#allocation3 + $0x20] sm:$0xff]
        %v442 = vld [vmem:[#allocation3 + $0x28] sm:$0xff]
        %v443 = vld [vmem:[#allocation3 + $0x30] sm:$0xff]
        %v444 = vld [vmem:[#allocation3 + $0x38] sm:$0xff]
        %v445 = vld [vmem:[#allocation3 + $0x40] sm:$0xff]
        %v446 = vld [vmem:[#allocation3 + $0x48] sm:$0xff]
        %v447 = vld [vmem:[#allocation3 + $0x50] sm:$0xff]
        %v448 = vld [vmem:[#allocation3 + $0x58] sm:$0xff]
        %v449 = vld [vmem:[#allocation3 + $0x60] sm:$0xff]
        %v450 = vld [vmem:[#allocation3 + $0x68] sm:$0xff]
        %v451 = vld [vmem:[#allocation3 + $0x70] sm:$0xff]
        %v452 = vld [vmem:[#allocation3 + $0x78] sm:$0xff]
        %v453 = vld [vmem:[#allocation3 + $0x80] sm:$0xff]
        %v454 = vld [vmem:[#allocation3 + $0x88] sm:$0xff]
        %v455 = vld [vmem:[#allocation3 + $0x90] sm:$0xff]
        %v456 = vld [vmem:[#allocation3 + $0x98] sm:$0xff]
        %v457 = vld [vmem:[#allocation3 + $0xa0] sm:$0xff]
        %v458 = vld [vmem:[#allocation3 + $0xa8] sm:$0xff]
        %v459 = vld [vmem:[#allocation3 + $0xb0] sm:$0xff]
        %v460 = vld [vmem:[#allocation3 + $0xb8] sm:$0xff]
        %v461 = vld [vmem:[#allocation3 + $0xc0] sm:$0xff]
        %v462 = vld [vmem:[#allocation3 + $0xc8] sm:$0xff]
        %v463 = vld [vmem:[#allocation3 + $0xd0] sm:$0xff]
        %v464 = vld [vmem:[#allocation3 + $0xd8] sm:$0xff]
        %v465 = vld [vmem:[#allocation3 + $0xe0] sm:$0xff]
        %v466 = vld [vmem:[#allocation3 + $0xe8] sm:$0xff]
        %v467 = vld [vmem:[#allocation3 + $0xf0] sm:$0xff]
        %v468 = vld [vmem:[#allocation3 + $0xf8] sm:$0xff]
        %v469 = vld [vmem:[%s164] sm:$0xff]
        %v470 = vld [vmem:[%s164 + $0x8] sm:$0xff]
        %v471 = vld [vmem:[%s164 + $0x10] sm:$0xff]
        %v472 = vld [vmem:[%s164 + $0x18] sm:$0xff]
        %v473 = vld [vmem:[%s164 + $0x20] sm:$0xff]
        %v474 = vld [vmem:[%s164 + $0x28] sm:$0xff]
        %v475 = vld [vmem:[%s164 + $0x30] sm:$0xff]
        %v476 = vld [vmem:[%s164 + $0x38] sm:$0xff]
        %v477 = vld [vmem:[%s164 + $0x40] sm:$0xff]
        %v478 = vld [vmem:[%s164 + $0x48] sm:$0xff]
        %v479 = vld [vmem:[%s164 + $0x50] sm:$0xff]
        %v480 = vld [vmem:[%s164 + $0x58] sm:$0xff]
        %v481 = vld [vmem:[%s164 + $0x60] sm:$0xff]
        %v482 = vld [vmem:[%s164 + $0x68] sm:$0xff]
        %v483 = vld [vmem:[%s164 + $0x70] sm:$0xff]
        %v484 = vld [vmem:[%s164 + $0x78] sm:$0xff]
        %v485 = vld [vmem:[%s164 + $0x80] sm:$0xff]
        %v486 = vld [vmem:[%s164 + $0x88] sm:$0xff]
        %v487 = vld [vmem:[%s164 + $0x90] sm:$0xff]
        %v488 = vld [vmem:[%s164 + $0x98] sm:$0xff]
        %v489 = vld [vmem:[%s164 + $0xa0] sm:$0xff]
        %v490 = vld [vmem:[%s164 + $0xa8] sm:$0xff]
        %v491 = vld [vmem:[%s164 + $0xb0] sm:$0xff]
        %v492 = vld [vmem:[%s164 + $0xb8] sm:$0xff]
        %v493 = vld [vmem:[%s164 + $0xc0] sm:$0xff]
        %v494 = vld [vmem:[%s164 + $0xc8] sm:$0xff]
        %v495 = vld [vmem:[%s164 + $0xd0] sm:$0xff]
        %v496 = vld [vmem:[%s164 + $0xd8] sm:$0xff]
        %v497 = vld [vmem:[%s164 + $0xe0] sm:$0xff]
        %v498 = vld [vmem:[%s164 + $0xe8] sm:$0xff]
        %v499 = vld [vmem:[%s164 + $0xf0] sm:$0xff]
        %v500 = vld [vmem:[%s164 + $0xf8] sm:$0xff]
        %v501 = vpack.c.bf16 %v406, %v405
        %v502 = vpack.c.bf16 %v408, %v407
        %v503 = vpack.c.bf16 %v410, %v409
        %v504 = vpack.c.bf16 %v412, %v411
        %v505 = vpack.c.bf16 %v414, %v413
        %v506 = vpack.c.bf16 %v416, %v415
        %v507 = vpack.c.bf16 %v418, %v417
        %v508 = vpack.c.bf16 %v420, %v419
        %v509 = vpack.c.bf16 %v422, %v421
        %v510 = vpack.c.bf16 %v424, %v423
        %v511 = vpack.c.bf16 %v426, %v425
        %v512 = vpack.c.bf16 %v428, %v427
        %v513 = vpack.c.bf16 %v430, %v429
        %v514 = vpack.c.bf16 %v432, %v431
        %v515 = vpack.c.bf16 %v434, %v433
        %v516 = vpack.c.bf16 %v436, %v435
        %v549 = vunpack.c.l.b16 %v469
        %v550 = vunpack.c.h.b16 %v469
        %v551 = vunpack.c.l.b16 %v470
        %v552 = vunpack.c.h.b16 %v470
        %v553 = vunpack.c.l.b16 %v471
        %v554 = vunpack.c.h.b16 %v471
        %v555 = vunpack.c.l.b16 %v472
        %v556 = vunpack.c.h.b16 %v472
        %v557 = vunpack.c.l.b16 %v473
        %v558 = vunpack.c.h.b16 %v473
        %v559 = vunpack.c.l.b16 %v474
        %v560 = vunpack.c.h.b16 %v474
        %v561 = vunpack.c.l.b16 %v475
        %v562 = vunpack.c.h.b16 %v475
        %v563 = vunpack.c.l.b16 %v476
        %v564 = vunpack.c.h.b16 %v476
        %v565 = vunpack.c.l.b16 %v477
        %v566 = vunpack.c.h.b16 %v477
        %v567 = vunpack.c.l.b16 %v478
        %v568 = vunpack.c.h.b16 %v478
        %v569 = vunpack.c.l.b16 %v479
        %v570 = vunpack.c.h.b16 %v479
        %v571 = vunpack.c.l.b16 %v480
        %v572 = vunpack.c.h.b16 %v480
        %v573 = vunpack.c.l.b16 %v481
        %v574 = vunpack.c.h.b16 %v481
        %v575 = vunpack.c.l.b16 %v482
        %v576 = vunpack.c.h.b16 %v482
        %v577 = vunpack.c.l.b16 %v483
        %v578 = vunpack.c.h.b16 %v483
        %v579 = vunpack.c.l.b16 %v484
        %v580 = vunpack.c.h.b16 %v484
        %v581 = vunpack.c.l.b16 %v485
        %v582 = vunpack.c.h.b16 %v485
        %v583 = vunpack.c.l.b16 %v486
        %v584 = vunpack.c.h.b16 %v486
        %v585 = vunpack.c.l.b16 %v487
        %v586 = vunpack.c.h.b16 %v487
        %v587 = vunpack.c.l.b16 %v488
        %v588 = vunpack.c.h.b16 %v488
        %v589 = vunpack.c.l.b16 %v489
        %v590 = vunpack.c.h.b16 %v489
        %v591 = vunpack.c.l.b16 %v490
        %v592 = vunpack.c.h.b16 %v490
        %v593 = vunpack.c.l.b16 %v491
        %v594 = vunpack.c.h.b16 %v491
        %v595 = vunpack.c.l.b16 %v492
        %v596 = vunpack.c.h.b16 %v492
        %v597 = vunpack.c.l.b16 %v493
        %v598 = vunpack.c.h.b16 %v493
        %v599 = vunpack.c.l.b16 %v494
        %v600 = vunpack.c.h.b16 %v494
        %v601 = vunpack.c.l.b16 %v495
        %v602 = vunpack.c.h.b16 %v495
        %v603 = vunpack.c.l.b16 %v496
        %v604 = vunpack.c.h.b16 %v496
        %v605 = vunpack.c.l.b16 %v497
        %v606 = vunpack.c.h.b16 %v497
        %v607 = vunpack.c.l.b16 %v498
        %v608 = vunpack.c.h.b16 %v498
        %v609 = vunpack.c.l.b16 %v499
        %v610 = vunpack.c.h.b16 %v499
        %v611 = vunpack.c.l.b16 %v500
        %v612 = vunpack.c.h.b16 %v500
        %v613 = vpack.c.b16 %v551, %v549
        %v614 = vpack.c.b16 %v552, %v550
        %v615 = vpack.c.b16 %v555, %v553
        %v616 = vpack.c.b16 %v556, %v554
        %v617 = vpack.c.b16 %v559, %v557
        %v618 = vpack.c.b16 %v560, %v558
        %v619 = vpack.c.b16 %v563, %v561
        %v620 = vpack.c.b16 %v564, %v562
        %v621 = vpack.c.b16 %v567, %v565
        %v622 = vpack.c.b16 %v568, %v566
        %v623 = vpack.c.b16 %v571, %v569
        %v624 = vpack.c.b16 %v572, %v570
        %v625 = vpack.c.b16 %v575, %v573
        %v626 = vpack.c.b16 %v576, %v574
        %v627 = vpack.c.b16 %v579, %v577
        %v628 = vpack.c.b16 %v580, %v578
        %v629 = vpack.c.b16 %v583, %v581
        %v630 = vpack.c.b16 %v584, %v582
        %v631 = vpack.c.b16 %v587, %v585
        %v632 = vpack.c.b16 %v588, %v586
        %v633 = vpack.c.b16 %v591, %v589
        %v634 = vpack.c.b16 %v592, %v590
        %v635 = vpack.c.b16 %v595, %v593
        %v636 = vpack.c.b16 %v596, %v594
        %v637 = vpack.c.b16 %v599, %v597
        %v638 = vpack.c.b16 %v600, %v598
        %v639 = vpack.c.b16 %v603, %v601
        %v640 = vpack.c.b16 %v604, %v602
        %v641 = vpack.c.b16 %v607, %v605
        %v642 = vpack.c.b16 %v608, %v606
        %v643 = vpack.c.b16 %v611, %v609
        %v644 = vpack.c.b16 %v612, %v610
        %677 = vmatprep.subr.bf16.mxu0 0
        %678 = vmatpush1.bf16.msra.mxu0 %v501
        %679 = vmatprep.subr.bf16.mxu0 0
        %680 = vmatpush1.bf16.msra.mxu0 %v502
        %681 = vmatprep.subr.bf16.mxu0 0
        %682 = vmatpush1.bf16.msra.mxu0 %v503
        %683 = vmatprep.subr.bf16.mxu0 0
        %684 = vmatpush1.bf16.msra.mxu0 %v504
        %685 = vmatprep.subr.bf16.mxu0 0
        %686 = vmatpush1.bf16.msra.mxu0 %v505
        %687 = vmatprep.subr.bf16.mxu0 0
        %688 = vmatpush1.bf16.msra.mxu0 %v506
        %689 = vmatprep.subr.bf16.mxu0 0
        %690 = vmatpush1.bf16.msra.mxu0 %v507
        %691 = vmatprep.subr.bf16.mxu0 0
        %692 = vmatpush1.bf16.msra.mxu0 %v508
        %693 = vmatprep.subr.bf16.mxu0 0
        %694 = vmatpush1.bf16.msra.mxu0 %v509
        %695 = vmatprep.subr.bf16.mxu0 0
        %696 = vmatpush1.bf16.msra.mxu0 %v510
        %697 = vmatprep.subr.bf16.mxu0 0
        %698 = vmatpush1.bf16.msra.mxu0 %v511
        %699 = vmatprep.subr.bf16.mxu0 0
        %700 = vmatpush1.bf16.msra.mxu0 %v512
        %701 = vmatprep.subr.bf16.mxu0 0
        %702 = vmatpush1.bf16.msra.mxu0 %v513
        %703 = vmatprep.subr.bf16.mxu0 0
        %704 = vmatpush1.bf16.msra.mxu0 %v514
        %705 = vmatprep.subr.bf16.mxu0 0
        %706 = vmatpush1.bf16.msra.mxu0 %v515
        %707 = vmatprep.subr.bf16.mxu0 0
        %708 = vmatpush1.bf16.msra.mxu0 %v516
        %709 = vmatprep.mubr.bf16.mxu0 %v614
        %710 = vmatmul.mubr.bf16.gmra.mrb[0].mxu0 %v613
        %v711 = vpop.f32.mrb[0].mxu0
        %v712 = vadd.f32 0.0, %v711
        %v713 = vpop.f32.mrb[0].mxu0
        %v714 = vpop.f32.mrb[0].mxu0
        %v715 = vadd.f32 0.0, %v714
        %v716 = vpop.f32.mrb[0].mxu0
        %717 = vmatprep.mubr.bf16.mxu0 %v616
        %718 = vmatmul.mubr.bf16.gmra.mrb[0].mxu0 %v615
        %v719 = vpop.f32.mrb[0].mxu0
        %v720 = vadd.f32 0.0, %v719
        %v721 = vpop.f32.mrb[0].mxu0
        %v722 = vpop.f32.mrb[0].mxu0
        %v723 = vadd.f32 0.0, %v722
        %v724 = vpop.f32.mrb[0].mxu0
        %725 = vmatprep.mubr.bf16.mxu0 %v618
        %726 = vmatmul.mubr.bf16.gmra.mrb[0].mxu0 %v617
        %v727 = vpop.f32.mrb[0].mxu0
        %v728 = vadd.f32 0.0, %v727
        %v729 = vpop.f32.mrb[0].mxu0
        %v730 = vpop.f32.mrb[0].mxu0
        %v731 = vadd.f32 0.0, %v730
        %v732 = vpop.f32.mrb[0].mxu0
        %733 = vmatprep.mubr.bf16.mxu0 %v620
        %734 = vmatmul.mubr.bf16.gmra.mrb[0].mxu0 %v619
        %v735 = vpop.f32.mrb[0].mxu0
        %v736 = vadd.f32 0.0, %v735
        %v737 = vpop.f32.mrb[0].mxu0
        %v738 = vpop.f32.mrb[0].mxu0
        %v739 = vadd.f32 0.0, %v738
        %v740 = vpop.f32.mrb[0].mxu0
        %741 = vmatprep.mubr.bf16.mxu0 %v622
        %742 = vmatmul.mubr.bf16.gmra.mrb[0].mxu0 %v621
        %v743 = vpop.f32.mrb[0].mxu0
        %v744 = vadd.f32 0.0, %v743
        %v745 = vpop.f32.mrb[0].mxu0
        %v746 = vpop.f32.mrb[0].mxu0
        %v747 = vadd.f32 0.0, %v746
        %v748 = vpop.f32.mrb[0].mxu0
        %749 = vmatprep.mubr.bf16.mxu0 %v624
        %750 = vmatmul.mubr.bf16.gmra.mrb[0].mxu0 %v623
        %v751 = vpop.f32.mrb[0].mxu0
        %v752 = vadd.f32 0.0, %v751
        %v753 = vpop.f32.mrb[0].mxu0
        %v754 = vpop.f32.mrb[0].mxu0
        %v755 = vadd.f32 0.0, %v754
        %v756 = vpop.f32.mrb[0].mxu0
        %757 = vmatprep.mubr.bf16.mxu0 %v626
        %758 = vmatmul.mubr.bf16.gmra.mrb[0].mxu0 %v625
        %v759 = vpop.f32.mrb[0].mxu0
        %v760 = vadd.f32 0.0, %v759
        %v761 = vpop.f32.mrb[0].mxu0
        %v762 = vpop.f32.mrb[0].mxu0
        %v763 = vadd.f32 0.0, %v762
        %v764 = vpop.f32.mrb[0].mxu0
        %765 = vmatprep.mubr.bf16.mxu0 %v628
        %766 = vmatmul.mubr.bf16.gmra.mrb[0].mxu0 %v627
        %v767 = vpop.f32.mrb[0].mxu0
        %v768 = vadd.f32 0.0, %v767
        %v769 = vpop.f32.mrb[0].mxu0
        %v770 = vpop.f32.mrb[0].mxu0
        %v771 = vadd.f32 0.0, %v770
        %v772 = vpop.f32.mrb[0].mxu0
        %773 = vmatprep.mubr.bf16.mxu0 %v630
        %774 = vmatmul.mubr.bf16.gmra.mrb[0].mxu0 %v629
        %v775 = vpop.f32.mrb[0].mxu0
        %v776 = vadd.f32 0.0, %v775
        %v777 = vpop.f32.mrb[0].mxu0
        %v778 = vpop.f32.mrb[0].mxu0
        %v779 = vadd.f32 0.0, %v778
        %v780 = vpop.f32.mrb[0].mxu0
        %781 = vmatprep.mubr.bf16.mxu0 %v632
        %782 = vmatmul.mubr.bf16.gmra.mrb[0].mxu0 %v631
        %v783 = vpop.f32.mrb[0].mxu0
        %v784 = vadd.f32 0.0, %v783
        %v785 = vpop.f32.mrb[0].mxu0
        %v786 = vpop.f32.mrb[0].mxu0
        %v787 = vadd.f32 0.0, %v786
        %v788 = vpop.f32.mrb[0].mxu0
        %789 = vmatprep.mubr.bf16.mxu0 %v634
        %790 = vmatmul.mubr.bf16.gmra.mrb[0].mxu0 %v633
        %v791 = vpop.f32.mrb[0].mxu0
        %v792 = vadd.f32 0.0, %v791
        %v793 = vpop.f32.mrb[0].mxu0
        %v794 = vpop.f32.mrb[0].mxu0
        %v795 = vadd.f32 0.0, %v794
        %v796 = vpop.f32.mrb[0].mxu0
        %797 = vmatprep.mubr.bf16.mxu0 %v636
        %798 = vmatmul.mubr.bf16.gmra.mrb[0].mxu0 %v635
        %v799 = vpop.f32.mrb[0].mxu0
        %v800 = vadd.f32 0.0, %v799
        %v801 = vpop.f32.mrb[0].mxu0
        %v802 = vpop.f32.mrb[0].mxu0
        %v803 = vadd.f32 0.0, %v802
        %v804 = vpop.f32.mrb[0].mxu0
        %805 = vmatprep.mubr.bf16.mxu0 %v638
        %806 = vmatmul.mubr.bf16.gmra.mrb[0].mxu0 %v637
        %v807 = vpop.f32.mrb[0].mxu0
        %v808 = vadd.f32 0.0, %v807
        %v809 = vpop.f32.mrb[0].mxu0
        %v810 = vpop.f32.mrb[0].mxu0
        %v811 = vadd.f32 0.0, %v810
        %v812 = vpop.f32.mrb[0].mxu0
        %813 = vmatprep.mubr.bf16.mxu0 %v640
        %814 = vmatmul.mubr.bf16.gmra.mrb[0].mxu0 %v639
        %v815 = vpop.f32.mrb[0].mxu0
        %v816 = vadd.f32 0.0, %v815
        %v817 = vpop.f32.mrb[0].mxu0
        %v818 = vpop.f32.mrb[0].mxu0
        %v819 = vadd.f32 0.0, %v818
        %v820 = vpop.f32.mrb[0].mxu0
        %821 = vmatprep.mubr.bf16.mxu0 %v642
        %822 = vmatmul.mubr.bf16.gmra.mrb[0].mxu0 %v641
        %v823 = vpop.f32.mrb[0].mxu0
        %v824 = vadd.f32 0.0, %v823
        %v825 = vpop.f32.mrb[0].mxu0
        %v826 = vpop.f32.mrb[0].mxu0
        %v827 = vadd.f32 0.0, %v826
        %v828 = vpop.f32.mrb[0].mxu0
        %829 = vmatprep.mubr.bf16.mxu0 %v644
        %830 = vmatmul.mubr.bf16.gmra.mrb[0].mxu0 %v643
        %v831 = vpop.f32.mrb[0].mxu0
        %v832 = vadd.f32 0.0, %v831
        %v833 = vpop.f32.mrb[0].mxu0
        %v834 = vpop.f32.mrb[0].mxu0
        %v835 = vadd.f32 0.0, %v834
        %v836 = vpop.f32.mrb[0].mxu0
        %837 = vdwg.mxu0
        %v838 = vadd.f32 %v437, %v712
        %v839 = vadd.f32 %v438, %v715
        %v840 = vadd.f32 %v439, %v720
        %v841 = vadd.f32 %v440, %v723
        %v842 = vadd.f32 %v441, %v728
        %v843 = vadd.f32 %v442, %v731
        %v844 = vadd.f32 %v443, %v736
        %v845 = vadd.f32 %v444, %v739
        %v846 = vadd.f32 %v445, %v744
        %v847 = vadd.f32 %v446, %v747
        %v848 = vadd.f32 %v447, %v752
        %v849 = vadd.f32 %v448, %v755
        %v850 = vadd.f32 %v449, %v760
        %v851 = vadd.f32 %v450, %v763
        %v852 = vadd.f32 %v451, %v768
        %v853 = vadd.f32 %v452, %v771
        %v854 = vadd.f32 %v453, %v776
        %v855 = vadd.f32 %v454, %v779
        %v856 = vadd.f32 %v455, %v784
        %v857 = vadd.f32 %v456, %v787
        %v858 = vadd.f32 %v457, %v792
        %v859 = vadd.f32 %v458, %v795
        %v860 = vadd.f32 %v459, %v800
        %v861 = vadd.f32 %v460, %v803
        %v862 = vadd.f32 %v461, %v808
        %v863 = vadd.f32 %v462, %v811
        %v864 = vadd.f32 %v463, %v816
        %v865 = vadd.f32 %v464, %v819
        %v866 = vadd.f32 %v465, %v824
        %v867 = vadd.f32 %v466, %v827
        %v868 = vadd.f32 %v467, %v832
        %v869 = vadd.f32 %v468, %v835
        %vm870 = vcmask 261120
        %871 = vst.msk [vmem:[#allocation3] sm:$0xff] %vm870, %v838
        %872 = vst.msk [vmem:[#allocation3 + $0x8] sm:$0xff] %vm870, %v839
        %873 = vst.msk [vmem:[#allocation3 + $0x10] sm:$0xff] %vm870, %v840
        %874 = vst.msk [vmem:[#allocation3 + $0x18] sm:$0xff] %vm870, %v841
        %875 = vst.msk [vmem:[#allocation3 + $0x20] sm:$0xff] %vm870, %v842
        %876 = vst.msk [vmem:[#allocation3 + $0x28] sm:$0xff] %vm870, %v843
        %877 = vst.msk [vmem:[#allocation3 + $0x30] sm:$0xff] %vm870, %v844
        %878 = vst.msk [vmem:[#allocation3 + $0x38] sm:$0xff] %vm870, %v845
        %879 = vst.msk [vmem:[#allocation3 + $0x40] sm:$0xff] %vm870, %v846
        %880 = vst.msk [vmem:[#allocation3 + $0x48] sm:$0xff] %vm870, %v847
        %881 = vst.msk [vmem:[#allocation3 + $0x50] sm:$0xff] %vm870, %v848
        %882 = vst.msk [vmem:[#allocation3 + $0x58] sm:$0xff] %vm870, %v849
        %883 = vst.msk [vmem:[#allocation3 + $0x60] sm:$0xff] %vm870, %v850
        %884 = vst.msk [vmem:[#allocation3 + $0x68] sm:$0xff] %vm870, %v851
        %885 = vst.msk [vmem:[#allocation3 + $0x70] sm:$0xff] %vm870, %v852
        %886 = vst.msk [vmem:[#allocation3 + $0x78] sm:$0xff] %vm870, %v853
        %887 = vst.msk [vmem:[#allocation3 + $0x80] sm:$0xff] %vm870, %v854
        %888 = vst.msk [vmem:[#allocation3 + $0x88] sm:$0xff] %vm870, %v855
        %889 = vst.msk [vmem:[#allocation3 + $0x90] sm:$0xff] %vm870, %v856
        %890 = vst.msk [vmem:[#allocation3 + $0x98] sm:$0xff] %vm870, %v857
        %891 = vst.msk [vmem:[#allocation3 + $0xa0] sm:$0xff] %vm870, %v858
        %892 = vst.msk [vmem:[#allocation3 + $0xa8] sm:$0xff] %vm870, %v859
        %893 = vst.msk [vmem:[#allocation3 + $0xb0] sm:$0xff] %vm870, %v860
        %894 = vst.msk [vmem:[#allocation3 + $0xb8] sm:$0xff] %vm870, %v861
        %895 = vst.msk [vmem:[#allocation3 + $0xc0] sm:$0xff] %vm870, %v862
        %896 = vst.msk [vmem:[#allocation3 + $0xc8] sm:$0xff] %vm870, %v863
        %897 = vst.msk [vmem:[#allocation3 + $0xd0] sm:$0xff] %vm870, %v864
        %898 = vst.msk [vmem:[#allocation3 + $0xd8] sm:$0xff] %vm870, %v865
        %899 = vst.msk [vmem:[#allocation3 + $0xe0] sm:$0xff] %vm870, %v866
        %900 = vst.msk [vmem:[#allocation3 + $0xe8] sm:$0xff] %vm870, %v867
        %901 = vst.msk [vmem:[#allocation3 + $0xf0] sm:$0xff] %vm870, %v868
        %902 = vst.msk [vmem:[#allocation3 + $0xf8] sm:$0xff] %vm870, %v869
        %p903 = scmp.eq.s32.totalorder %s23, 1
        // Predicated region
        $region41: #{tpu_custom_call.1} parent=27 // pred_check
          %p904 = pneg %p903
        $region42: #{tpu_custom_call.1} parent=27 // pred_check_branch
          %906 = sbr.rel (%p904) target = $region44
        $region43: #{tpu_custom_call.1} parent=27 // pred_region
          %v907 = vld [vmem:[#allocation3] sm:$0xff]
          %v908 = vld [vmem:[#allocation3 + $0x8] sm:$0xff]
          %v909 = vld [vmem:[#allocation3 + $0x10] sm:$0xff]
          %v910 = vld [vmem:[#allocation3 + $0x18] sm:$0xff]
          %v911 = vld [vmem:[#allocation3 + $0x20] sm:$0xff]
          %v912 = vld [vmem:[#allocation3 + $0x28] sm:$0xff]
          %v913 = vld [vmem:[#allocation3 + $0x30] sm:$0xff]
          %v914 = vld [vmem:[#allocation3 + $0x38] sm:$0xff]
          %v915 = vld [vmem:[#allocation3 + $0x40] sm:$0xff]
          %v916 = vld [vmem:[#allocation3 + $0x48] sm:$0xff]
          %v917 = vld [vmem:[#allocation3 + $0x50] sm:$0xff]
          %v918 = vld [vmem:[#allocation3 + $0x58] sm:$0xff]
          %v919 = vld [vmem:[#allocation3 + $0x60] sm:$0xff]
          %v920 = vld [vmem:[#allocation3 + $0x68] sm:$0xff]
          %v921 = vld [vmem:[#allocation3 + $0x70] sm:$0xff]
          %v922 = vld [vmem:[#allocation3 + $0x78] sm:$0xff]
          %v923 = vld [vmem:[#allocation3 + $0x80] sm:$0xff]
          %v924 = vld [vmem:[#allocation3 + $0x88] sm:$0xff]
          %v925 = vld [vmem:[#allocation3 + $0x90] sm:$0xff]
          %v926 = vld [vmem:[#allocation3 + $0x98] sm:$0xff]
          %v927 = vld [vmem:[#allocation3 + $0xa0] sm:$0xff]
          %v928 = vld [vmem:[#allocation3 + $0xa8] sm:$0xff]
          %v929 = vld [vmem:[#allocation3 + $0xb0] sm:$0xff]
          %v930 = vld [vmem:[#allocation3 + $0xb8] sm:$0xff]
          %v931 = vld [vmem:[#allocation3 + $0xc0] sm:$0xff]
          %v932 = vld [vmem:[#allocation3 + $0xc8] sm:$0xff]
          %v933 = vld [vmem:[#allocation3 + $0xd0] sm:$0xff]
          %v934 = vld [vmem:[#allocation3 + $0xd8] sm:$0xff]
          %v935 = vld [vmem:[#allocation3 + $0xe0] sm:$0xff]
          %v936 = vld [vmem:[#allocation3 + $0xe8] sm:$0xff]
          %v937 = vld [vmem:[#allocation3 + $0xf0] sm:$0xff]
          %v938 = vld [vmem:[#allocation3 + $0xf8] sm:$0xff]
          %939 = vst.msk [vmem:[%s199] sm:$0xff] %vm870, %v907
          %940 = vst.msk [vmem:[%s199 + $0x8] sm:$0xff] %vm870, %v908
          %941 = vst.msk [vmem:[%s199 + $0x10] sm:$0xff] %vm870, %v909
          %942 = vst.msk [vmem:[%s199 + $0x18] sm:$0xff] %vm870, %v910
          %943 = vst.msk [vmem:[%s199 + $0x20] sm:$0xff] %vm870, %v911
          %944 = vst.msk [vmem:[%s199 + $0x28] sm:$0xff] %vm870, %v912
          %945 = vst.msk [vmem:[%s199 + $0x30] sm:$0xff] %vm870, %v913
          %946 = vst.msk [vmem:[%s199 + $0x38] sm:$0xff] %vm870, %v914
          %947 = vst.msk [vmem:[%s199 + $0x40] sm:$0xff] %vm870, %v915
          %948 = vst.msk [vmem:[%s199 + $0x48] sm:$0xff] %vm870, %v916
          %949 = vst.msk [vmem:[%s199 + $0x50] sm:$0xff] %vm870, %v917
          %950 = vst.msk [vmem:[%s199 + $0x58] sm:$0xff] %vm870, %v918
          %951 = vst.msk [vmem:[%s199 + $0x60] sm:$0xff] %vm870, %v919
          %952 = vst.msk [vmem:[%s199 + $0x68] sm:$0xff] %vm870, %v920
          %953 = vst.msk [vmem:[%s199 + $0x70] sm:$0xff] %vm870, %v921
          %954 = vst.msk [vmem:[%s199 + $0x78] sm:$0xff] %vm870, %v922
          %955 = vst.msk [vmem:[%s199 + $0x80] sm:$0xff] %vm870, %v923
          %956 = vst.msk [vmem:[%s199 + $0x88] sm:$0xff] %vm870, %v924
          %957 = vst.msk [vmem:[%s199 + $0x90] sm:$0xff] %vm870, %v925
          %958 = vst.msk [vmem:[%s199 + $0x98] sm:$0xff] %vm870, %v926
          %959 = vst.msk [vmem:[%s199 + $0xa0] sm:$0xff] %vm870, %v927
          %960 = vst.msk [vmem:[%s199 + $0xa8] sm:$0xff] %vm870, %v928
          %961 = vst.msk [vmem:[%s199 + $0xb0] sm:$0xff] %vm870, %v929
          %962 = vst.msk [vmem:[%s199 + $0xb8] sm:$0xff] %vm870, %v930
          %963 = vst.msk [vmem:[%s199 + $0xc0] sm:$0xff] %vm870, %v931
          %964 = vst.msk [vmem:[%s199 + $0xc8] sm:$0xff] %vm870, %v932
          %965 = vst.msk [vmem:[%s199 + $0xd0] sm:$0xff] %vm870, %v933
          %966 = vst.msk [vmem:[%s199 + $0xd8] sm:$0xff] %vm870, %v934
          %967 = vst.msk [vmem:[%s199 + $0xe0] sm:$0xff] %vm870, %v935
          %968 = vst.msk [vmem:[%s199 + $0xe8] sm:$0xff] %vm870, %v936
          %969 = vst.msk [vmem:[%s199 + $0xf0] sm:$0xff] %vm870, %v937
          %970 = vst.msk [vmem:[%s199 + $0xf8] sm:$0xff] %vm870, %v938
          %s971 = smul.u32 %s400, 512
          %s972 = smul.u32 %s22, 256
          %s973 = sadd.s32 %s971, %s972
          %s974 = scalar_lea.vmem [#allocation2], %s973
          %975 = vst.msk [vmem:[%s974] sm:$0xff] %vm870, %v907
          %976 = vst.msk [vmem:[%s974 + $0x8] sm:$0xff] %vm870, %v908
          %977 = vst.msk [vmem:[%s974 + $0x10] sm:$0xff] %vm870, %v909
          %978 = vst.msk [vmem:[%s974 + $0x18] sm:$0xff] %vm870, %v910
          %979 = vst.msk [vmem:[%s974 + $0x20] sm:$0xff] %vm870, %v911
          %980 = vst.msk [vmem:[%s974 + $0x28] sm:$0xff] %vm870, %v912
          %981 = vst.msk [vmem:[%s974 + $0x30] sm:$0xff] %vm870, %v913
          %982 = vst.msk [vmem:[%s974 + $0x38] sm:$0xff] %vm870, %v914
          %983 = vst.msk [vmem:[%s974 + $0x40] sm:$0xff] %vm870, %v915
          %984 = vst.msk [vmem:[%s974 + $0x48] sm:$0xff] %vm870, %v916
          %985 = vst.msk [vmem:[%s974 + $0x50] sm:$0xff] %vm870, %v917
          %986 = vst.msk [vmem:[%s974 + $0x58] sm:$0xff] %vm870, %v918
          %987 = vst.msk [vmem:[%s974 + $0x60] sm:$0xff] %vm870, %v919
          %988 = vst.msk [vmem:[%s974 + $0x68] sm:$0xff] %vm870, %v920
          %989 = vst.msk [vmem:[%s974 + $0x70] sm:$0xff] %vm870, %v921
          %990 = vst.msk [vmem:[%s974 + $0x78] sm:$0xff] %vm870, %v922
          %991 = vst.msk [vmem:[%s974 + $0x80] sm:$0xff] %vm870, %v923
          %992 = vst.msk [vmem:[%s974 + $0x88] sm:$0xff] %vm870, %v924
          %993 = vst.msk [vmem:[%s974 + $0x90] sm:$0xff] %vm870, %v925
          %994 = vst.msk [vmem:[%s974 + $0x98] sm:$0xff] %vm870, %v926
          %995 = vst.msk [vmem:[%s974 + $0xa0] sm:$0xff] %vm870, %v927
          %996 = vst.msk [vmem:[%s974 + $0xa8] sm:$0xff] %vm870, %v928
          %997 = vst.msk [vmem:[%s974 + $0xb0] sm:$0xff] %vm870, %v929
          %998 = vst.msk [vmem:[%s974 + $0xb8] sm:$0xff] %vm870, %v930
          %999 = vst.msk [vmem:[%s974 + $0xc0] sm:$0xff] %vm870, %v931
          %1000 = vst.msk [vmem:[%s974 + $0xc8] sm:$0xff] %vm870, %v932
          %1001 = vst.msk [vmem:[%s974 + $0xd0] sm:$0xff] %vm870, %v933
          %1002 = vst.msk [vmem:[%s974 + $0xd8] sm:$0xff] %vm870, %v934
          %1003 = vst.msk [vmem:[%s974 + $0xe0] sm:$0xff] %vm870, %v935
          %1004 = vst.msk [vmem:[%s974 + $0xe8] sm:$0xff] %vm870, %v936
          %1005 = vst.msk [vmem:[%s974 + $0xf0] sm:$0xff] %vm870, %v937
          %1006 = vst.msk [vmem:[%s974 + $0xf8] sm:$0xff] %vm870, %v938
        $region44: #{tpu_custom_call.1} parent=27 // pred_fallthru
          _
        %s1007 = smul.u32 32, %s22
        %p1008 = scmp.lt.s32.totalorder %s21, 7
        %s1009 = scalar_select %p1008, %s21, 7
        %p1010 = scmp.lt.s32.totalorder %s1007, 63
        %s1011 = scalar_select %p1010, %s1007, 63
        %s1012 = smul.addr %s1009, 64
        %s1013 = sadd.s32 %s1011, %s1012
        %s1014 = smul.addr %s1013, 8
        %s1015 = scalar_lea.vmem %s2, %s1014
        // Predicated region
        $region45: #{tpu_custom_call.1} parent=27 // pred_check
          %p1016 = pneg %p104
        $region46: #{tpu_custom_call.1} parent=27 // pred_check_branch
          %1018 = sbr.rel (%p1016) target = $region48
        $region47: #{tpu_custom_call.1} parent=27 // pred_region
          %s1019 = smul.u32 32, %s22
        $region48: #{tpu_custom_call.1} parent=27 // pred_fallthru
          _
      $region28: #{tpu_custom_call.1} parent=5 // pred_fallthru
        _
      %p1020 = scmp.le.s32.totalorder 2, %s11
      // Predicated region
      $region49: #{tpu_custom_call.1} parent=5 // pred_check
        %p1021 = pneg %p1020
      $region50: #{tpu_custom_call.1} parent=5 // pred_check_branch
        %1023 = sbr.rel (%p1021) target = $region52
      $region51: #{tpu_custom_call.1} parent=5 // pred_region
        %s1024 = ssub.s32 %s11, 2
        // Predicated region
        $region53: #{tpu_custom_call.1} parent=51 // pred_check
          %p1025 = pneg %p110
        $region54: #{tpu_custom_call.1} parent=51 // pred_check_branch
          %1027 = sbr.rel (%p1025) target = $region56
        $region55: #{tpu_custom_call.1} parent=51 // pred_region
          %s1028 = smul.u32 32, %s25
          %p1029 = scmp.lt.s32.totalorder %s24, 7
          %s1030 = scalar_select %p1029, %s24, 7
          %p1031 = scmp.lt.s32.totalorder %s1028, 63
          %s1032 = scalar_select %p1031, %s1028, 63
          %s1033 = smul.addr %s1030, 64
          %s1034 = sadd.s32 %s1032, %s1033
          %s1035 = smul.addr %s1034, 8
          %s1036 = scalar_lea.vmem %s2, %s1035
        $region56: #{tpu_custom_call.1} parent=51 // pred_fallthru
          _
      $region52: #{tpu_custom_call.1} parent=5 // pred_fallthru
        _
    $region6: #{tpu_custom_call.1} parent=1 // loop_footer
      %s15 = sadd.s32 1, %s11
    $region7: #{tpu_custom_call.1} parent=1 // loop_footer_branch
      %10 = sbr.rel target = $region3
    $region8: #{tpu_custom_call.1} parent=1 // loop_exit
      _
    %1037 = vsyncpa [#allocation5], 1
    %s1038 = scalar_lea.sflag [#allocation5], 1
    %1039 = vsyncpa %s1038, 1

</llo_original>
